<compile_context>
chip_gen: v7x
topology: tpu7x:2x2x1
jax: 0.10.0
libtpu: 0.0.40
codegen_flags: <defaults>
</compile_context>

<pallas_src>
import jax
import jax.numpy as jnp
from jax.experimental import pallas as pl
from jax.experimental.pallas import tpu as pltpu

IN_DIM = 7          # X.shape[1] in the reference script
H1, H2, H3 = 64, 32, 16
N_CLASSES = 2       # n_classes = number of valid actions ('đi chơi', 'nghỉ ngơi')
NEG_SLOPE = 0.01    # nn.LeakyReLU default
TARGET_TILE_B = 8192   # target batch columns per grid step
MAX_TILE_B = 16384     # cap so intermediates stay a few MB even on v7x


def _leaky_relu(x):
    return jnp.where(x >= 0, x, NEG_SLOPE * x)


def mlp_kernel(x_ref,
               w1_ref, b1_ref,
               w2_ref, b2_ref,
               w3_ref, b3_ref,
               w4_ref, b4_ref,
               o_ref):
    # x_ref: (IN_DIM, TILE_B); the batch lives on the 128-wide lane axis.
    x = x_ref[...].astype(jnp.float32)

    # Linear(7, 64) + LeakyReLU            -> (64, TILE_B)
    h = jnp.dot(w1_ref[...], x, preferred_element_type=jnp.float32) + b1_ref[...]
    h = _leaky_relu(h)
    # TODO(synk): nn.Dropout(0.3) is identity in eval mode; training-mode dropout
    # (pltpu.prng_seed + prng_random_bits mask) not implemented here.

    # Linear(64, 32) + LeakyReLU           -> (32, TILE_B)
    h = jnp.dot(w2_ref[...], h, preferred_element_type=jnp.float32) + b2_ref[...]
    h = _leaky_relu(h)

    # Linear(32, 16) + LeakyReLU           -> (16, TILE_B)
    h = jnp.dot(w3_ref[...], h, preferred_element_type=jnp.float32) + b3_ref[...]
    h = _leaky_relu(h)

    # Linear(16, n_classes)                -> (2, TILE_B)
    out = jnp.dot(w4_ref[...], h, preferred_element_type=jnp.float32) + b4_ref[...]
    o_ref[...] = out.astype(o_ref.dtype)


def _round_up(n, m):
    return ((n + m - 1) // m) * m


def _choose_tile(batch, target=TARGET_TILE_B, cap=MAX_TILE_B):
    """Batch tile: multiple of 128 lanes, ~target columns, even grid-step count."""
    batch = max(batch, 1)
    n_steps = -(-batch // target)
    if n_steps > 1 and n_steps % 2:
        n_steps += 1                      # even split for v7x's two TensorCores
    tb = _round_up(-(-batch // n_steps), 128)
    return min(tb, cap)


def mlp_forward(x, params, *, stream_dtype=jnp.bfloat16):
    """x: [B, 7] float32; params: dict (see init_params). Returns [B, n_classes] f32."""
    B = x.shape[0]
    tb = _choose_tile(B)
    padded_B = _round_up(max(B, 1), tb)

    # Feature-major (batch-on-lanes) layout for the kernel: (7, padded_B).
    x_t = x.T
    if padded_B != B:
        x_t = jnp.pad(x_t, ((0, 0), (0, padded_B - B)))
    # Halve the input HBM stream; exact for these small-integer features.
    x_t = x_t.astype(stream_dtype)

    grid = (padded_B // tb,)

    args = (
        x_t,
        params["w1"], params["b1"],
        params["w2"], params["b2"],
        params["w3"], params["b3"],
        params["w4"], params["b4"],
    )

    # Weights/biases use constant index_maps so they stay VMEM-resident across
    # all grid steps (no per-tile re-DMA); ~13 KB total so the default
    # double-buffer bookkeeping is negligible.
    def _resident_spec(arr):
        return pl.BlockSpec(arr.shape, lambda i: (0, 0))

    in_specs = [pl.BlockSpec((IN_DIM, tb), lambda i: (0, i))]
    for p in args[1:]:
        in_specs.append(_resident_spec(p))

    out_t = pl.pallas_call(
        mlp_kernel,
        out_shape=jax.ShapeDtypeStruct((N_CLASSES, padded_B), jnp.float32),
        grid=grid,
        in_specs=in_specs,
        out_specs=pl.BlockSpec((N_CLASSES, tb), lambda i: (0, i)),
        compiler_params=pltpu.CompilerParams(
            dimension_semantics=("parallel",),
            vmem_limit_bytes=32 * 1024 * 1024),
    )(*args)

    # Back to row-major [B, n_classes]; the (2, B) transpose is tiny XLA work.
    return out_t[:, :B].T


def init_params(key):
    """PyTorch-style uniform(+/- 1/sqrt(fan_in)) init for the 4 Linear layers.

    Weights are stored [out, in] (PyTorch layout); biases as [out, 1] so they
    broadcast over the lane (batch) axis inside the kernel.
    """
    dims = [(IN_DIM, H1), (H1, H2), (H2, H3), (H3, N_CLASSES)]
    params = {}
    for i, (fan_in, fan_out) in enumerate(dims, start=1):
        key, kw, kb = jax.random.split(key, 3)
        bound = 1.0 / jnp.sqrt(jnp.float32(fan_in))
        params[f"w{i}"] = jax.random.uniform(
            kw, (fan_out, fan_in), jnp.float32, minval=-bound, maxval=bound)
        params[f"b{i}"] = jax.random.uniform(
            kb, (fan_out, 1), jnp.float32, minval=-bound, maxval=bound)
    return params


def mlp_reference(x, params):
    """Plain-JAX (row-major) reference for correctness checking."""
    h = _leaky_relu(x @ params["w1"].T + params["b1"].T)
    h = _leaky_relu(h @ params["w2"].T + params["b2"].T)
    h = _leaky_relu(h @ params["w3"].T + params["b3"].T)
    return h @ params["w4"].T + params["b4"].T


if __name__ == "__main__":
    key = jax.random.PRNGKey(0)
    key, kx = jax.random.split(key)

    batch = 8
    # Features mimic weather_enc, mood_enc, is_weather_good, is_mood_positive,
    # logic_and, logic_or, logic_xor — small integer-ish values cast to float.
    x = jax.random.randint(kx, (batch, IN_DIM), 0, 3).astype(jnp.float32)

    params = init_params(key)

    out = mlp_forward(x, params)
    out = jax.block_until_ready(out)

    ref = mlp_reference(x, params)
    assert out.shape == (batch, N_CLASSES)
    assert jnp.allclose(out, ref, atol=1e-5, rtol=1e-5), "mismatch vs reference"

    # Also exercise the padded / multi-step path with a batch that is not a
    # multiple of 128 (adaptive tiling picks tb=2560, single lane-dense step).
    key, kx2 = jax.random.split(key)
    big_batch = 2500
    x_big = jax.random.randint(kx2, (big_batch, IN_DIM), 0, 3).astype(jnp.float32)
    out_big = jax.block_until_ready(mlp_forward(x_big, params))
    ref_big = mlp_reference(x_big, params)
    assert out_big.shape == (big_batch, N_CLASSES)
    assert jnp.allclose(out_big, ref_big, atol=1e-4, rtol=1e-5), "mismatch (big batch)"

    print("KERNEL_OK")
</pallas_src>

<mosaic_0001>
module attributes {stable_mosaic.version = 11 : i64} {
  func.func @mlp_kernel(%arg0: i32, %arg1: memref<7x128xbf16, #tpu.memory_space<vmem>>, %arg2: memref<64x7xf32, #tpu.memory_space<vmem>>, %arg3: memref<64x1xf32, #tpu.memory_space<vmem>>, %arg4: memref<32x64xf32, #tpu.memory_space<vmem>>, %arg5: memref<32x1xf32, #tpu.memory_space<vmem>>, %arg6: memref<16x32xf32, #tpu.memory_space<vmem>>, %arg7: memref<16x1xf32, #tpu.memory_space<vmem>>, %arg8: memref<2x16xf32, #tpu.memory_space<vmem>>, %arg9: memref<2x1xf32, #tpu.memory_space<vmem>>, %arg10: memref<2x128xf32, #tpu.memory_space<vmem>>) attributes {dimension_semantics = [#tpu.dimension_semantics<parallel>], iteration_bounds = array<i64: 1>, scalar_prefetch = 0 : i64, scratch_operands = 0 : i64, tpu.core_type = #tpu.core_type<tc>, window_params = [{transform_indices = @transform_0, window_bounds = array<i64: 7, 128>}, {pipeline_mode = #tpu.pipeline_mode<synchronous>, transform_indices = @transform_1, window_bounds = array<i64: 64, 7>}, {pipeline_mode = #tpu.pipeline_mode<synchronous>, transform_indices = @transform_2, window_bounds = array<i64: 64, 1>}, {pipeline_mode = #tpu.pipeline_mode<synchronous>, transform_indices = @transform_3, window_bounds = array<i64: 32, 64>}, {pipeline_mode = #tpu.pipeline_mode<synchronous>, transform_indices = @transform_4, window_bounds = array<i64: 32, 1>}, {pipeline_mode = #tpu.pipeline_mode<synchronous>, transform_indices = @transform_5, window_bounds = array<i64: 16, 32>}, {pipeline_mode = #tpu.pipeline_mode<synchronous>, transform_indices = @transform_6, window_bounds = array<i64: 16, 1>}, {pipeline_mode = #tpu.pipeline_mode<synchronous>, transform_indices = @transform_7, window_bounds = array<i64: 2, 16>}, {pipeline_mode = #tpu.pipeline_mode<synchronous>, transform_indices = @transform_8, window_bounds = array<i64: 2, 1>}, {transform_indices = @transform_9, window_bounds = array<i64: 2, 128>}]} {
    %c0 = arith.constant 0 : index
    %c0_0 = arith.constant 0 : index
    %0 = vector.load %arg1[%c0, %c0_0] : memref<7x128xbf16, #tpu.memory_space<vmem>>, vector<7x128xbf16>
    %1 = arith.extf %0 : vector<7x128xbf16> to vector<7x128xf32>
    %c0_1 = arith.constant 0 : index
    %c0_2 = arith.constant 0 : index
    %2 = vector.load %arg2[%c0_1, %c0_2] : memref<64x7xf32, #tpu.memory_space<vmem>>, vector<64x7xf32>
    %cst = arith.constant dense<0.000000e+00> : vector<64x128xf32>
    %3 = tpu.matmul %2, %1, %cst {dimension_numbers = #tpu.dot_dimension_numbers<[1], [0], [0], [1], [0, 0, 1, 1], [], []>} : vector<64x7xf32>, vector<7x128xf32>, vector<64x128xf32> -> vector<64x128xf32>
    %c0_3 = arith.constant 0 : index
    %c0_4 = arith.constant 0 : index
    %4 = vector.load %arg3[%c0_3, %c0_4] : memref<64x1xf32, #tpu.memory_space<vmem>>, vector<64x1xf32>
    %5 = vector.broadcast %4 : vector<64x1xf32> to vector<64x128xf32>
    %6 = arith.addf %3, %5 : vector<64x128xf32>
    %cst_5 = arith.constant 0.000000e+00 : f32
    %7 = vector.broadcast %cst_5 : f32 to vector<64x128xf32>
    %8 = arith.cmpf oge, %6, %7 : vector<64x128xf32>
    %cst_6 = arith.constant 0.00999999977 : f32
    %9 = vector.broadcast %cst_6 : f32 to vector<64x128xf32>
    %10 = arith.mulf %9, %6 : vector<64x128xf32>
    %11 = arith.select %8, %6, %10 : vector<64x128xi1>, vector<64x128xf32>
    %c0_7 = arith.constant 0 : index
    %c0_8 = arith.constant 0 : index
    %12 = vector.load %arg4[%c0_7, %c0_8] : memref<32x64xf32, #tpu.memory_space<vmem>>, vector<32x64xf32>
    %cst_9 = arith.constant dense<0.000000e+00> : vector<32x128xf32>
    %13 = tpu.matmul %12, %11, %cst_9 {dimension_numbers = #tpu.dot_dimension_numbers<[1], [0], [0], [1], [0, 0, 1, 1], [], []>} : vector<32x64xf32>, vector<64x128xf32>, vector<32x128xf32> -> vector<32x128xf32>
    %c0_10 = arith.constant 0 : index
    %c0_11 = arith.constant 0 : index
    %14 = vector.load %arg5[%c0_10, %c0_11] : memref<32x1xf32, #tpu.memory_space<vmem>>, vector<32x1xf32>
    %15 = vector.broadcast %14 : vector<32x1xf32> to vector<32x128xf32>
    %16 = arith.addf %13, %15 : vector<32x128xf32>
    %cst_12 = arith.constant 0.000000e+00 : f32
    %17 = vector.broadcast %cst_12 : f32 to vector<32x128xf32>
    %18 = arith.cmpf oge, %16, %17 : vector<32x128xf32>
    %cst_13 = arith.constant 0.00999999977 : f32
    %19 = vector.broadcast %cst_13 : f32 to vector<32x128xf32>
    %20 = arith.mulf %19, %16 : vector<32x128xf32>
    %21 = arith.select %18, %16, %20 : vector<32x128xi1>, vector<32x128xf32>
    %c0_14 = arith.constant 0 : index
    %c0_15 = arith.constant 0 : index
    %22 = vector.load %arg6[%c0_14, %c0_15] : memref<16x32xf32, #tpu.memory_space<vmem>>, vector<16x32xf32>
    %cst_16 = arith.constant dense<0.000000e+00> : vector<16x128xf32>
    %23 = tpu.matmul %22, %21, %cst_16 {dimension_numbers = #tpu.dot_dimension_numbers<[1], [0], [0], [1], [0, 0, 1, 1], [], []>} : vector<16x32xf32>, vector<32x128xf32>, vector<16x128xf32> -> vector<16x128xf32>
    %c0_17 = arith.constant 0 : index
    %c0_18 = arith.constant 0 : index
    %24 = vector.load %arg7[%c0_17, %c0_18] : memref<16x1xf32, #tpu.memory_space<vmem>>, vector<16x1xf32>
    %25 = vector.broadcast %24 : vector<16x1xf32> to vector<16x128xf32>
    %26 = arith.addf %23, %25 : vector<16x128xf32>
    %cst_19 = arith.constant 0.000000e+00 : f32
    %27 = vector.broadcast %cst_19 : f32 to vector<16x128xf32>
    %28 = arith.cmpf oge, %26, %27 : vector<16x128xf32>
    %cst_20 = arith.constant 0.00999999977 : f32
    %29 = vector.broadcast %cst_20 : f32 to vector<16x128xf32>
    %30 = arith.mulf %29, %26 : vector<16x128xf32>
    %31 = arith.select %28, %26, %30 : vector<16x128xi1>, vector<16x128xf32>
    %c0_21 = arith.constant 0 : index
    %c0_22 = arith.constant 0 : index
    %32 = vector.load %arg8[%c0_21, %c0_22] : memref<2x16xf32, #tpu.memory_space<vmem>>, vector<2x16xf32>
    %cst_23 = arith.constant dense<0.000000e+00> : vector<2x128xf32>
    %33 = tpu.matmul %32, %31, %cst_23 {dimension_numbers = #tpu.dot_dimension_numbers<[1], [0], [0], [1], [0, 0, 1, 1], [], []>} : vector<2x16xf32>, vector<16x128xf32>, vector<2x128xf32> -> vector<2x128xf32>
    %c0_24 = arith.constant 0 : index
    %c0_25 = arith.constant 0 : index
    %34 = vector.load %arg9[%c0_24, %c0_25] : memref<2x1xf32, #tpu.memory_space<vmem>>, vector<2x1xf32>
    %35 = vector.broadcast %34 : vector<2x1xf32> to vector<2x128xf32>
    %36 = arith.addf %33, %35 : vector<2x128xf32>
    %c0_26 = arith.constant 0 : index
    %c0_27 = arith.constant 0 : index
    %37 = vector.load %arg10[%c0_26, %c0_27] : memref<2x128xf32, #tpu.memory_space<vmem>>, vector<2x128xf32>
    tpu.vector_store %arg10[%c0_26, %c0_27], %36 {strides = array<i32>} : memref<2x128xf32, #tpu.memory_space<vmem>>, vector<2x128xf32>,
    return
  }
  func.func @transform_0(%arg0: i32) -> (i32, i32) {
    %c0_i32 = arith.constant 0 : i32
    %c0_i32_0 = arith.constant 0 : i32
    return %c0_i32, %arg0 : i32, i32
  }
  func.func @transform_1(%arg0: i32) -> (i32, i32) {
    %c0_i32 = arith.constant 0 : i32
    %c0_i32_0 = arith.constant 0 : i32
    %c0_i32_1 = arith.constant 0 : i32
    return %c0_i32, %c0_i32_0 : i32, i32
  }
  func.func @transform_2(%arg0: i32) -> (i32, i32) {
    %c0_i32 = arith.constant 0 : i32
    %c0_i32_0 = arith.constant 0 : i32
    %c0_i32_1 = arith.constant 0 : i32
    return %c0_i32, %c0_i32_0 : i32, i32
  }
  func.func @transform_3(%arg0: i32) -> (i32, i32) {
    %c0_i32 = arith.constant 0 : i32
    %c0_i32_0 = arith.constant 0 : i32
    %c0_i32_1 = arith.constant 0 : i32
    return %c0_i32, %c0_i32_0 : i32, i32
  }
  func.func @transform_4(%arg0: i32) -> (i32, i32) {
    %c0_i32 = arith.constant 0 : i32
    %c0_i32_0 = arith.constant 0 : i32
    %c0_i32_1 = arith.constant 0 : i32
    return %c0_i32, %c0_i32_0 : i32, i32
  }
  func.func @transform_5(%arg0: i32) -> (i32, i32) {
    %c0_i32 = arith.constant 0 : i32
    %c0_i32_0 = arith.constant 0 : i32
    %c0_i32_1 = arith.constant 0 : i32
    return %c0_i32, %c0_i32_0 : i32, i32
  }
  func.func @transform_6(%arg0: i32) -> (i32, i32) {
    %c0_i32 = arith.constant 0 : i32
    %c0_i32_0 = arith.constant 0 : i32
    %c0_i32_1 = arith.constant 0 : i32
    return %c0_i32, %c0_i32_0 : i32, i32
  }
  func.func @transform_7(%arg0: i32) -> (i32, i32) {
    %c0_i32 = arith.constant 0 : i32
    %c0_i32_0 = arith.constant 0 : i32
    %c0_i32_1 = arith.constant 0 : i32
    return %c0_i32, %c0_i32_0 : i32, i32
  }
  func.func @transform_8(%arg0: i32) -> (i32, i32) {
    %c0_i32 = arith.constant 0 : i32
    %c0_i32_0 = arith.constant 0 : i32
    %c0_i32_1 = arith.constant 0 : i32
    return %c0_i32, %c0_i32_0 : i32, i32
  }
  func.func @transform_9(%arg0: i32) -> (i32, i32) {
    %c0_i32 = arith.constant 0 : i32
    %c0_i32_0 = arith.constant 0 : i32
    return %c0_i32, %arg0 : i32, i32
  }
}

</mosaic_0001>

<llo_original>
// kernel: tpu_custom_call.1
$region0: #{tpu_custom_call.1}
  #allocation0 [shape = 'u32[]', space=smem, size = 0x4, offset = 0x4, fixed_abs, tag = 'smem constant byte address 0x4 - core index']
  #allocation1 [shape = 'u32[144,128]{1,0:T(1,128)}', space=vmem, size = 0x12000, scoped, tag = 'internal scratch']
  %s0 = inlined_call_operand.vmem [shape: bf16[7,128], index: 0, kind: input, shape index: {}]
  %s1 = inlined_call_operand.vmem [shape: f32[64,7], index: 1, kind: input, shape index: {}]
  %s2 = inlined_call_operand.vmem [shape: f32[64,1], index: 2, kind: input, shape index: {}]
  %s3 = inlined_call_operand.vmem [shape: f32[32,64], index: 3, kind: input, shape index: {}]
  %s4 = inlined_call_operand.vmem [shape: f32[32,1], index: 4, kind: input, shape index: {}]
  %s5 = inlined_call_operand.vmem [shape: f32[16,32], index: 5, kind: input, shape index: {}]
  %s6 = inlined_call_operand.vmem [shape: f32[16,1], index: 6, kind: input, shape index: {}]
  %s7 = inlined_call_operand.vmem [shape: f32[2,16], index: 7, kind: input, shape index: {}]
  %s8 = inlined_call_operand.vmem [shape: f32[2,1], index: 8, kind: input, shape index: {}]
  %s9 = inlined_call_operand.hbm [shape: f32[2,128], index: 9, kind: output, shape index: {}]
  %s10 = sld [smem:[#allocation0]]
  $region46: #{tpu_custom_call.1} parent=0
    _
  %s12 = ssub.s32 1, %s10
  %s13 = scalar_select 0, %s12, %s10
  $region1: #{tpu_custom_call.1} parent=0
    #allocation2 [shape = 'u8[1024]{0}', space=vmem, size = 0x400, scoped, tag = 'output window, operand 0, single buffered']
    #allocation3 [shape = 's32[1]{0}', space=sflag, size = 0x4, scoped, tag = 'scoped memory for tpu_custom_call.1']
    %14 = vsyncpa [#allocation3], 0
    // Predicated region
    $region2: #{tpu_custom_call.1} parent=1 // pred_check
      _
    $region3: #{tpu_custom_call.1} parent=1 // pred_check_branch
      %16 = sbr.rel (0) target = $region5
    $region4: #{tpu_custom_call.1} parent=1 // pred_region
      _
    $region5: #{tpu_custom_call.1} parent=1 // pred_fallthru
      _
    // Predicated region
    $region6: #{tpu_custom_call.1} parent=1 // pred_check
      _
    $region7: #{tpu_custom_call.1} parent=1 // pred_check_branch
      %18 = sbr.rel (0) target = $region9
    $region8: #{tpu_custom_call.1} parent=1 // pred_region
      _
    $region9: #{tpu_custom_call.1} parent=1 // pred_fallthru
      _
    // Predicated region
    $region10: #{tpu_custom_call.1} parent=1 // pred_check
      _
    $region11: #{tpu_custom_call.1} parent=1 // pred_check_branch
      %20 = sbr.rel (0) target = $region13
    $region12: #{tpu_custom_call.1} parent=1 // pred_region
      _
    $region13: #{tpu_custom_call.1} parent=1 // pred_fallthru
      _
    // Predicated region
    $region14: #{tpu_custom_call.1} parent=1 // pred_check
      _
    $region15: #{tpu_custom_call.1} parent=1 // pred_check_branch
      %22 = sbr.rel (0) target = $region17
    $region16: #{tpu_custom_call.1} parent=1 // pred_region
      _
    $region17: #{tpu_custom_call.1} parent=1 // pred_fallthru
      _
    // Predicated region
    $region18: #{tpu_custom_call.1} parent=1 // pred_check
      _
    $region19: #{tpu_custom_call.1} parent=1 // pred_check_branch
      %24 = sbr.rel (0) target = $region21
    $region20: #{tpu_custom_call.1} parent=1 // pred_region
      _
    $region21: #{tpu_custom_call.1} parent=1 // pred_fallthru
      _
    // Predicated region
    $region22: #{tpu_custom_call.1} parent=1 // pred_check
      _
    $region23: #{tpu_custom_call.1} parent=1 // pred_check_branch
      %26 = sbr.rel (0) target = $region25
    $region24: #{tpu_custom_call.1} parent=1 // pred_region
      _
    $region25: #{tpu_custom_call.1} parent=1 // pred_fallthru
      _
    // Predicated region
    $region26: #{tpu_custom_call.1} parent=1 // pred_check
      _
    $region27: #{tpu_custom_call.1} parent=1 // pred_check_branch
      %28 = sbr.rel (0) target = $region29
    $region28: #{tpu_custom_call.1} parent=1 // pred_region
      _
    $region29: #{tpu_custom_call.1} parent=1 // pred_fallthru
      _
    // Predicated region
    $region30: #{tpu_custom_call.1} parent=1 // pred_check
      _
    $region31: #{tpu_custom_call.1} parent=1 // pred_check_branch
      %30 = sbr.rel (0) target = $region33
    $region32: #{tpu_custom_call.1} parent=1 // pred_region
      _
    $region33: #{tpu_custom_call.1} parent=1 // pred_fallthru
      _
    // Predicated region
    $region34: #{tpu_custom_call.1} parent=1 // pred_check
      _
    $region35: #{tpu_custom_call.1} parent=1 // pred_check_branch
      %32 = sbr.rel (0) target = $region37
    $region36: #{tpu_custom_call.1} parent=1 // pred_region
      _
    $region37: #{tpu_custom_call.1} parent=1 // pred_fallthru
      _
    %v33 = vld [vmem:[%s0] sm:$0xf]
    %v34 = vunpack.c.l.bf16 %v33
    %v35 = vld [vmem:[%s1] sm:$0xff]
    %v36 = vld [vmem:[%s1 + $0x8] sm:$0xff]
    %v37 = vld [vmem:[%s1 + $0x10] sm:$0xff]
    %v38 = vld [vmem:[%s1 + $0x18] sm:$0xff]
    %v39 = vld [vmem:[%s1 + $0x20] sm:$0xff]
    %v40 = vld [vmem:[%s1 + $0x28] sm:$0xff]
    %v41 = vld [vmem:[%s1 + $0x30] sm:$0xff]
    %v42 = vld [vmem:[%s1 + $0x38] sm:$0xff]
    %v43 = vld [vmem:[%s2] sm:$0xff]
    %v44 = vld [vmem:[%s2 + $0x8] sm:$0xff]
    %v45 = vld [vmem:[%s2 + $0x10] sm:$0xff]
    %v46 = vld [vmem:[%s2 + $0x18] sm:$0xff]
    %v47 = vld [vmem:[%s2 + $0x20] sm:$0xff]
    %v48 = vld [vmem:[%s2 + $0x28] sm:$0xff]
    %v49 = vld [vmem:[%s2 + $0x30] sm:$0xff]
    %v50 = vld [vmem:[%s2 + $0x38] sm:$0xff]
    %52 = vset.pattern.permute.xlu0 0
    %53 = vperm.xlu0 %52, %v43
    %v54 = vpop.permute.xlu0 %53
    %57 = vset.pattern.permute.xlu0 0
    %58 = vperm.xlu0 %57, %v44
    %v59 = vpop.permute.xlu0 %58
    %62 = vset.pattern.permute.xlu0 0
    %63 = vperm.xlu0 %62, %v45
    %v64 = vpop.permute.xlu0 %63
    %67 = vset.pattern.permute.xlu0 0
    %68 = vperm.xlu0 %67, %v46
    %v69 = vpop.permute.xlu0 %68
    %72 = vset.pattern.permute.xlu0 0
    %73 = vperm.xlu0 %72, %v47
    %v74 = vpop.permute.xlu0 %73
    %77 = vset.pattern.permute.xlu0 0
    %78 = vperm.xlu0 %77, %v48
    %v79 = vpop.permute.xlu0 %78
    %82 = vset.pattern.permute.xlu0 0
    %83 = vperm.xlu0 %82, %v49
    %v84 = vpop.permute.xlu0 %83
    %87 = vset.pattern.permute.xlu0 0
    %88 = vperm.xlu0 %87, %v50
    %v89 = vpop.permute.xlu0 %88
    %vm91 = vcmask 56320
    %v93 = vsel %vm91, %v35, 0
    %v96 = vsel %vm91, %v36, 0
    %v99 = vsel %vm91, %v37, 0
    %v102 = vsel %vm91, %v38, 0
    %v105 = vsel %vm91, %v39, 0
    %v108 = vsel %vm91, %v40, 0
    %v111 = vsel %vm91, %v41, 0
    %v114 = vsel %vm91, %v42, 0
    %vm116 = vcmask 1046528
    %v118 = vsel %vm116, %v34, 0
    %120 = vmatprep.subr.mxu0 0.0
    %121 = vmatpush1.msra.mxu0 %v118
    %122 = vmatprep.subr.mxu0 0.0
    %123 = vmatpush1.msra.mxu0 0.0
    %124 = vmatprep.subr.mxu0 0.0
    %125 = vmatpush1.msra.mxu0 0.0
    %126 = vmatprep.subr.mxu0 0.0
    %127 = vmatpush1.msra.mxu0 0.0
    %128 = vmatprep.subr.mxu0 0.0
    %129 = vmatpush1.msra.mxu0 0.0
    %130 = vmatprep.subr.mxu0 0.0
    %131 = vmatpush1.msra.mxu0 0.0
    %132 = vmatprep.subr.mxu0 0.0
    %133 = vmatpush1.msra.mxu0 0.0
    %134 = vmatprep.subr.mxu0 0.0
    %135 = vmatpush1.msra.mxu0 0.0
    %136 = vmatprep.subr.mxu0 0.0
    %137 = vmatpush1.msra.mxu0 0.0
    %138 = vmatprep.subr.mxu0 0.0
    %139 = vmatpush1.msra.mxu0 0.0
    %140 = vmatprep.subr.mxu0 0.0
    %141 = vmatpush1.msra.mxu0 0.0
    %142 = vmatprep.subr.mxu0 0.0
    %143 = vmatpush1.msra.mxu0 0.0
    %144 = vmatprep.subr.mxu0 0.0
    %145 = vmatpush1.msra.mxu0 0.0
    %146 = vmatprep.subr.mxu0 0.0
    %147 = vmatpush1.msra.mxu0 0.0
    %148 = vmatprep.subr.mxu0 0.0
    %149 = vmatpush1.msra.mxu0 0.0
    %150 = vmatprep.subr.mxu0 0.0
    %151 = vmatpush1.msra.mxu0 0.0
    %152 = vmatprep.subr.mxu0 0.0
    %153 = vmatpush1.msra.mxu0 0.0
    %154 = vmatprep.subr.mxu0 0.0
    %155 = vmatpush1.msra.mxu0 0.0
    %156 = vmatprep.subr.mxu0 0.0
    %157 = vmatpush1.msra.mxu0 0.0
    %158 = vmatprep.subr.mxu0 0.0
    %159 = vmatpush1.msra.mxu0 0.0
    %160 = vmatprep.subr.mxu0 0.0
    %161 = vmatpush1.msra.mxu0 0.0
    %162 = vmatprep.subr.mxu0 0.0
    %163 = vmatpush1.msra.mxu0 0.0
    %164 = vmatprep.subr.mxu0 0.0
    %165 = vmatpush1.msra.mxu0 0.0
    %166 = vmatprep.subr.mxu0 0.0
    %167 = vmatpush1.msra.mxu0 0.0
    %168 = vmatprep.subr.mxu0 0.0
    %169 = vmatpush1.msra.mxu0 0.0
    %170 = vmatprep.subr.mxu0 0.0
    %171 = vmatpush1.msra.mxu0 0.0
    %172 = vmatprep.subr.mxu0 0.0
    %173 = vmatpush1.msra.mxu0 0.0
    %174 = vmatprep.subr.mxu0 0.0
    %175 = vmatpush1.msra.mxu0 0.0
    %176 = vmatprep.subr.mxu0 0.0
    %177 = vmatpush1.msra.mxu0 0.0
    %178 = vmatprep.subr.mxu0 0.0
    %179 = vmatpush1.msra.mxu0 0.0
    %180 = vmatprep.subr.mxu0 0.0
    %181 = vmatpush1.msra.mxu0 0.0
    %182 = vmatprep.subr.mxu0 0.0
    %183 = vmatpush1.msra.mxu0 0.0
    %184 = vmatprep.mubr.f32.mxu0 0.0
    %185 = vmatmul.mubr.f32.gmra.mrb[0].mxu0 %v93
    %v186 = vpop.f32.mrb[0].mxu0
    %v187 = vadd.f32 %v54, %v186
    %v188 = vpop.f32.mrb[0].mxu0
    %189 = vmatprep.mubr.f32.mxu0 0.0
    %190 = vmatmul.mubr.f32.gmra.mrb[0].mxu0 %v96
    %v191 = vpop.f32.mrb[0].mxu0
    %v192 = vadd.f32 %v59, %v191
    %v193 = vpop.f32.mrb[0].mxu0
    %194 = vmatprep.mubr.f32.mxu0 0.0
    %195 = vmatmul.mubr.f32.gmra.mrb[0].mxu0 %v99
    %v196 = vpop.f32.mrb[0].mxu0
    %v197 = vadd.f32 %v64, %v196
    %v198 = vpop.f32.mrb[0].mxu0
    %199 = vmatprep.mubr.f32.mxu0 0.0
    %200 = vmatmul.mubr.f32.gmra.mrb[0].mxu0 %v102
    %v201 = vpop.f32.mrb[0].mxu0
    %v202 = vadd.f32 %v69, %v201
    %v203 = vpop.f32.mrb[0].mxu0
    %204 = vmatprep.mubr.f32.mxu0 0.0
    %205 = vmatmul.mubr.f32.gmra.mrb[0].mxu0 %v105
    %v206 = vpop.f32.mrb[0].mxu0
    %v207 = vadd.f32 %v74, %v206
    %v208 = vpop.f32.mrb[0].mxu0
    %209 = vmatprep.mubr.f32.mxu0 0.0
    %210 = vmatmul.mubr.f32.gmra.mrb[0].mxu0 %v108
    %v211 = vpop.f32.mrb[0].mxu0
    %v212 = vadd.f32 %v79, %v211
    %v213 = vpop.f32.mrb[0].mxu0
    %214 = vmatprep.mubr.f32.mxu0 0.0
    %215 = vmatmul.mubr.f32.gmra.mrb[0].mxu0 %v111
    %v216 = vpop.f32.mrb[0].mxu0
    %v217 = vadd.f32 %v84, %v216
    %v218 = vpop.f32.mrb[0].mxu0
    %219 = vmatprep.mubr.f32.mxu0 0.0
    %220 = vmatmul.mubr.f32.gmra.mrb[0].mxu0 %v114
    %v221 = vpop.f32.mrb[0].mxu0
    %v222 = vadd.f32 %v89, %v221
    %v223 = vpop.f32.mrb[0].mxu0
    %224 = vdwg.mxu0
    %vm225 = vcmp.ge.f32.partialorder %v187, 0.0
    %vm226 = vcmp.ge.f32.partialorder %v192, 0.0
    %vm227 = vcmp.ge.f32.partialorder %v197, 0.0
    %vm228 = vcmp.ge.f32.partialorder %v202, 0.0
    %vm229 = vcmp.ge.f32.partialorder %v207, 0.0
    %vm230 = vcmp.ge.f32.partialorder %v212, 0.0
    %vm231 = vcmp.ge.f32.partialorder %v217, 0.0
    %vm232 = vcmp.ge.f32.partialorder %v222, 0.0
    %v233 = vmul.f32 %v187, 0.01
    %v234 = vmul.f32 %v192, 0.01
    %v235 = vmul.f32 %v197, 0.01
    %v236 = vmul.f32 %v202, 0.01
    %v237 = vmul.f32 %v207, 0.01
    %v238 = vmul.f32 %v212, 0.01
    %v239 = vmul.f32 %v217, 0.01
    %v240 = vmul.f32 %v222, 0.01
    %v241 = vsel %vm225, %v187, %v233
    %v242 = vsel %vm226, %v192, %v234
    %v243 = vsel %vm227, %v197, %v235
    %v244 = vsel %vm228, %v202, %v236
    %v245 = vsel %vm229, %v207, %v237
    %v246 = vsel %vm230, %v212, %v238
    %v247 = vsel %vm231, %v217, %v239
    %v248 = vsel %vm232, %v222, %v240
    %v249 = vld [vmem:[%s3] sm:$0xff]
    %v250 = vld [vmem:[%s3 + $0x8] sm:$0xff]
    %v251 = vld [vmem:[%s3 + $0x10] sm:$0xff]
    %v252 = vld [vmem:[%s3 + $0x18] sm:$0xff]
    %v253 = vld [vmem:[%s4] sm:$0xff]
    %v254 = vld [vmem:[%s4 + $0x8] sm:$0xff]
    %v255 = vld [vmem:[%s4 + $0x10] sm:$0xff]
    %v256 = vld [vmem:[%s4 + $0x18] sm:$0xff]
    %258 = vset.pattern.permute.xlu0 0
    %259 = vperm.xlu0 %258, %v253
    %v260 = vpop.permute.xlu0 %259
    %263 = vset.pattern.permute.xlu0 0
    %264 = vperm.xlu0 %263, %v254
    %v265 = vpop.permute.xlu0 %264
    %268 = vset.pattern.permute.xlu0 0
    %269 = vperm.xlu0 %268, %v255
    %v270 = vpop.permute.xlu0 %269
    %273 = vset.pattern.permute.xlu0 0
    %274 = vperm.xlu0 %273, %v256
    %v275 = vpop.permute.xlu0 %274
    %vm277 = vcmask 523264
    %v279 = vsel %vm277, %v249, 0
    %v282 = vsel %vm277, %v250, 0
    %v285 = vsel %vm277, %v251, 0
    %v288 = vsel %vm277, %v252, 0
    %290 = vmatprep.subr.mxu0 0.0
    %291 = vmatpush1.msra.mxu0 %v241
    %292 = vmatprep.subr.mxu0 0.0
    %293 = vmatpush1.msra.mxu0 %v242
    %294 = vmatprep.subr.mxu0 0.0
    %295 = vmatpush1.msra.mxu0 %v243
    %296 = vmatprep.subr.mxu0 0.0
    %297 = vmatpush1.msra.mxu0 %v244
    %298 = vmatprep.subr.mxu0 0.0
    %299 = vmatpush1.msra.mxu0 %v245
    %300 = vmatprep.subr.mxu0 0.0
    %301 = vmatpush1.msra.mxu0 %v246
    %302 = vmatprep.subr.mxu0 0.0
    %303 = vmatpush1.msra.mxu0 %v247
    %304 = vmatprep.subr.mxu0 0.0
    %305 = vmatpush1.msra.mxu0 %v248
    %306 = vmatprep.subr.mxu0 0.0
    %307 = vmatpush1.msra.mxu0 0.0
    %308 = vmatprep.subr.mxu0 0.0
    %309 = vmatpush1.msra.mxu0 0.0
    %310 = vmatprep.subr.mxu0 0.0
    %311 = vmatpush1.msra.mxu0 0.0
    %312 = vmatprep.subr.mxu0 0.0
    %313 = vmatpush1.msra.mxu0 0.0
    %314 = vmatprep.subr.mxu0 0.0
    %315 = vmatpush1.msra.mxu0 0.0
    %316 = vmatprep.subr.mxu0 0.0
    %317 = vmatpush1.msra.mxu0 0.0
    %318 = vmatprep.subr.mxu0 0.0
    %319 = vmatpush1.msra.mxu0 0.0
    %320 = vmatprep.subr.mxu0 0.0
    %321 = vmatpush1.msra.mxu0 0.0
    %322 = vmatprep.subr.mxu0 0.0
    %323 = vmatpush1.msra.mxu0 0.0
    %324 = vmatprep.subr.mxu0 0.0
    %325 = vmatpush1.msra.mxu0 0.0
    %326 = vmatprep.subr.mxu0 0.0
    %327 = vmatpush1.msra.mxu0 0.0
    %328 = vmatprep.subr.mxu0 0.0
    %329 = vmatpush1.msra.mxu0 0.0
    %330 = vmatprep.subr.mxu0 0.0
    %331 = vmatpush1.msra.mxu0 0.0
    %332 = vmatprep.subr.mxu0 0.0
    %333 = vmatpush1.msra.mxu0 0.0
    %334 = vmatprep.subr.mxu0 0.0
    %335 = vmatpush1.msra.mxu0 0.0
    %336 = vmatprep.subr.mxu0 0.0
    %337 = vmatpush1.msra.mxu0 0.0
    %338 = vmatprep.subr.mxu0 0.0
    %339 = vmatpush1.msra.mxu0 0.0
    %340 = vmatprep.subr.mxu0 0.0
    %341 = vmatpush1.msra.mxu0 0.0
    %342 = vmatprep.subr.mxu0 0.0
    %343 = vmatpush1.msra.mxu0 0.0
    %344 = vmatprep.subr.mxu0 0.0
    %345 = vmatpush1.msra.mxu0 0.0
    %346 = vmatprep.subr.mxu0 0.0
    %347 = vmatpush1.msra.mxu0 0.0
    %348 = vmatprep.subr.mxu0 0.0
    %349 = vmatpush1.msra.mxu0 0.0
    %350 = vmatprep.subr.mxu0 0.0
    %351 = vmatpush1.msra.mxu0 0.0
    %352 = vmatprep.subr.mxu0 0.0
    %353 = vmatpush1.msra.mxu0 0.0
    %354 = vmatprep.mubr.f32.mxu0 0.0
    %355 = vmatmul.mubr.f32.gmra.mrb[0].mxu0 %v279
    %v356 = vpop.f32.mrb[0].mxu0
    %v357 = vadd.f32 %v260, %v356
    %v358 = vpop.f32.mrb[0].mxu0
    %359 = vmatprep.mubr.f32.mxu0 0.0
    %360 = vmatmul.mubr.f32.gmra.mrb[0].mxu0 %v282
    %v361 = vpop.f32.mrb[0].mxu0
    %v362 = vadd.f32 %v265, %v361
    %v363 = vpop.f32.mrb[0].mxu0
    %364 = vmatprep.mubr.f32.mxu0 0.0
    %365 = vmatmul.mubr.f32.gmra.mrb[0].mxu0 %v285
    %v366 = vpop.f32.mrb[0].mxu0
    %v367 = vadd.f32 %v270, %v366
    %v368 = vpop.f32.mrb[0].mxu0
    %369 = vmatprep.mubr.f32.mxu0 0.0
    %370 = vmatmul.mubr.f32.gmra.mrb[0].mxu0 %v288
    %v371 = vpop.f32.mrb[0].mxu0
    %v372 = vadd.f32 %v275, %v371
    %v373 = vpop.f32.mrb[0].mxu0
    %374 = vdwg.mxu0
    %vm375 = vcmp.ge.f32.partialorder %v357, 0.0
    %vm376 = vcmp.ge.f32.partialorder %v362, 0.0
    %vm377 = vcmp.ge.f32.partialorder %v367, 0.0
    %vm378 = vcmp.ge.f32.partialorder %v372, 0.0
    %v379 = vmul.f32 %v357, 0.01
    %v380 = vmul.f32 %v362, 0.01
    %v381 = vmul.f32 %v367, 0.01
    %v382 = vmul.f32 %v372, 0.01
    %v383 = vsel %vm375, %v357, %v379
    %v384 = vsel %vm376, %v362, %v380
    %v385 = vsel %vm377, %v367, %v381
    %v386 = vsel %vm378, %v372, %v382
    %v387 = vld [vmem:[%s5] sm:$0xff]
    %v388 = vld [vmem:[%s5 + $0x8] sm:$0xff]
    %v389 = vld [vmem:[%s6] sm:$0xff]
    %v390 = vld [vmem:[%s6 + $0x8] sm:$0xff]
    %392 = vset.pattern.permute.xlu0 0
    %393 = vperm.xlu0 %392, %v389
    %v394 = vpop.permute.xlu0 %393
    %397 = vset.pattern.permute.xlu0 0
    %398 = vperm.xlu0 %397, %v390
    %v399 = vpop.permute.xlu0 %398
    %vm401 = vcmask 261120
    %v403 = vsel %vm401, %v387, 0
    %v406 = vsel %vm401, %v388, 0
    %408 = vmatprep.subr.mxu0 0.0
    %409 = vmatpush1.msra.mxu0 %v383
    %410 = vmatprep.subr.mxu0 0.0
    %411 = vmatpush1.msra.mxu0 %v384
    %412 = vmatprep.subr.mxu0 0.0
    %413 = vmatpush1.msra.mxu0 %v385
    %414 = vmatprep.subr.mxu0 0.0
    %415 = vmatpush1.msra.mxu0 %v386
    %416 = vmatprep.subr.mxu0 0.0
    %417 = vmatpush1.msra.mxu0 0.0
    %418 = vmatprep.subr.mxu0 0.0
    %419 = vmatpush1.msra.mxu0 0.0
    %420 = vmatprep.subr.mxu0 0.0
    %421 = vmatpush1.msra.mxu0 0.0
    %422 = vmatprep.subr.mxu0 0.0
    %423 = vmatpush1.msra.mxu0 0.0
    %424 = vmatprep.subr.mxu0 0.0
    %425 = vmatpush1.msra.mxu0 0.0
    %426 = vmatprep.subr.mxu0 0.0
    %427 = vmatpush1.msra.mxu0 0.0
    %428 = vmatprep.subr.mxu0 0.0
    %429 = vmatpush1.msra.mxu0 0.0
    %430 = vmatprep.subr.mxu0 0.0
    %431 = vmatpush1.msra.mxu0 0.0
    %432 = vmatprep.subr.mxu0 0.0
    %433 = vmatpush1.msra.mxu0 0.0
    %434 = vmatprep.subr.mxu0 0.0
    %435 = vmatpush1.msra.mxu0 0.0
    %436 = vmatprep.subr.mxu0 0.0
    %437 = vmatpush1.msra.mxu0 0.0
    %438 = vmatprep.subr.mxu0 0.0
    %439 = vmatpush1.msra.mxu0 0.0
    %440 = vmatprep.subr.mxu0 0.0
    %441 = vmatpush1.msra.mxu0 0.0
    %442 = vmatprep.subr.mxu0 0.0
    %443 = vmatpush1.msra.mxu0 0.0
    %444 = vmatprep.subr.mxu0 0.0
    %445 = vmatpush1.msra.mxu0 0.0
    %446 = vmatprep.subr.mxu0 0.0
    %447 = vmatpush1.msra.mxu0 0.0
    %448 = vmatprep.subr.mxu0 0.0
    %449 = vmatpush1.msra.mxu0 0.0
    %450 = vmatprep.subr.mxu0 0.0
    %451 = vmatpush1.msra.mxu0 0.0
    %452 = vmatprep.subr.mxu0 0.0
    %453 = vmatpush1.msra.mxu0 0.0
    %454 = vmatprep.subr.mxu0 0.0
    %455 = vmatpush1.msra.mxu0 0.0
    %456 = vmatprep.subr.mxu0 0.0
    %457 = vmatpush1.msra.mxu0 0.0
    %458 = vmatprep.subr.mxu0 0.0
    %459 = vmatpush1.msra.mxu0 0.0
    %460 = vmatprep.subr.mxu0 0.0
    %461 = vmatpush1.msra.mxu0 0.0
    %462 = vmatprep.subr.mxu0 0.0
    %463 = vmatpush1.msra.mxu0 0.0
    %464 = vmatprep.subr.mxu0 0.0
    %465 = vmatpush1.msra.mxu0 0.0
    %466 = vmatprep.subr.mxu0 0.0
    %467 = vmatpush1.msra.mxu0 0.0
    %468 = vmatprep.subr.mxu0 0.0
    %469 = vmatpush1.msra.mxu0 0.0
    %470 = vmatprep.subr.mxu0 0.0
    %471 = vmatpush1.msra.mxu0 0.0
    %472 = vmatprep.mubr.f32.mxu0 0.0
    %473 = vmatmul.mubr.f32.gmra.mrb[0].mxu0 %v403
    %v474 = vpop.f32.mrb[0].mxu0
    %v475 = vadd.f32 %v394, %v474
    %v476 = vpop.f32.mrb[0].mxu0
    %477 = vmatprep.mubr.f32.mxu0 0.0
    %478 = vmatmul.mubr.f32.gmra.mrb[0].mxu0 %v406
    %v479 = vpop.f32.mrb[0].mxu0
    %v480 = vadd.f32 %v399, %v479
    %v481 = vpop.f32.mrb[0].mxu0
    %482 = vdwg.mxu0
    %vm483 = vcmp.ge.f32.partialorder %v475, 0.0
    %vm484 = vcmp.ge.f32.partialorder %v480, 0.0
    %v485 = vmul.f32 %v475, 0.01
    %v486 = vmul.f32 %v480, 0.01
    %v487 = vsel %vm483, %v475, %v485
    %v488 = vsel %vm484, %v480, %v486
    %v489 = vld [vmem:[%s7] sm:$0x3]
    %v490 = vld [vmem:[%s8] sm:$0x3]
    %492 = vset.pattern.permute.xlu0 0
    %493 = vperm.xlu0 %492, %v490
    %v494 = vpop.permute.xlu0 %493
    %vm496 = vcmask 130048
    %v498 = vsel %vm496, %v489, 0
    %500 = vmatprep.subr.mxu0 0.0
    %501 = vmatpush1.msra.mxu0 %v487
    %502 = vmatprep.subr.mxu0 0.0
    %503 = vmatpush1.msra.mxu0 %v488
    %504 = vmatprep.subr.mxu0 0.0
    %505 = vmatpush1.msra.mxu0 0.0
    %506 = vmatprep.subr.mxu0 0.0
    %507 = vmatpush1.msra.mxu0 0.0
    %508 = vmatprep.subr.mxu0 0.0
    %509 = vmatpush1.msra.mxu0 0.0
    %510 = vmatprep.subr.mxu0 0.0
    %511 = vmatpush1.msra.mxu0 0.0
    %512 = vmatprep.subr.mxu0 0.0
    %513 = vmatpush1.msra.mxu0 0.0
    %514 = vmatprep.subr.mxu0 0.0
    %515 = vmatpush1.msra.mxu0 0.0
    %516 = vmatprep.subr.mxu0 0.0
    %517 = vmatpush1.msra.mxu0 0.0
    %518 = vmatprep.subr.mxu0 0.0
    %519 = vmatpush1.msra.mxu0 0.0
    %520 = vmatprep.subr.mxu0 0.0
    %521 = vmatpush1.msra.mxu0 0.0
    %522 = vmatprep.subr.mxu0 0.0
    %523 = vmatpush1.msra.mxu0 0.0
    %524 = vmatprep.subr.mxu0 0.0
    %525 = vmatpush1.msra.mxu0 0.0
    %526 = vmatprep.subr.mxu0 0.0
    %527 = vmatpush1.msra.mxu0 0.0
    %528 = vmatprep.subr.mxu0 0.0
    %529 = vmatpush1.msra.mxu0 0.0
    %530 = vmatprep.subr.mxu0 0.0
    %531 = vmatpush1.msra.mxu0 0.0
    %532 = vmatprep.subr.mxu0 0.0
    %533 = vmatpush1.msra.mxu0 0.0
    %534 = vmatprep.subr.mxu0 0.0
    %535 = vmatpush1.msra.mxu0 0.0
    %536 = vmatprep.subr.mxu0 0.0
    %537 = vmatpush1.msra.mxu0 0.0
    %538 = vmatprep.subr.mxu0 0.0
    %539 = vmatpush1.msra.mxu0 0.0
    %540 = vmatprep.subr.mxu0 0.0
    %541 = vmatpush1.msra.mxu0 0.0
    %542 = vmatprep.subr.mxu0 0.0
    %543 = vmatpush1.msra.mxu0 0.0
    %544 = vmatprep.subr.mxu0 0.0
    %545 = vmatpush1.msra.mxu0 0.0
    %546 = vmatprep.subr.mxu0 0.0
    %547 = vmatpush1.msra.mxu0 0.0
    %548 = vmatprep.subr.mxu0 0.0
    %549 = vmatpush1.msra.mxu0 0.0
    %550 = vmatprep.subr.mxu0 0.0
    %551 = vmatpush1.msra.mxu0 0.0
    %552 = vmatprep.subr.mxu0 0.0
    %553 = vmatpush1.msra.mxu0 0.0
    %554 = vmatprep.subr.mxu0 0.0
    %555 = vmatpush1.msra.mxu0 0.0
    %556 = vmatprep.subr.mxu0 0.0
    %557 = vmatpush1.msra.mxu0 0.0
    %558 = vmatprep.subr.mxu0 0.0
    %559 = vmatpush1.msra.mxu0 0.0
    %560 = vmatprep.subr.mxu0 0.0
    %561 = vmatpush1.msra.mxu0 0.0
    %562 = vmatprep.subr.mxu0 0.0
    %563 = vmatpush1.msra.mxu0 0.0
    %564 = vmatprep.mubr.f32.mxu0 0.0
    %565 = vmatmul.mubr.f32.gmra.mrb[0].mxu0 %v498
    %v566 = vpop.f32.mrb[0].mxu0
    %v567 = vadd.f32 %v494, %v566
    %v568 = vpop.f32.mrb[0].mxu0
    %569 = vdwg.mxu0
    %570 = vst [vmem:[#allocation2] sm:$0x3] %v567
    // Predicated region
    $region38: #{tpu_custom_call.1} parent=1 // pred_check
      _
    $region39: #{tpu_custom_call.1} parent=1 // pred_check_branch
      %572 = sbr.rel (0) target = $region41
    $region40: #{tpu_custom_call.1} parent=1 // pred_region
      %s574 = ssub.s32 32, 32
      %575 = vsyncadd [#allocation3], %s574
      %s577 = sshll.u32 [#allocation2], 4
      %s578 = int_to_ptr.vmem [resolvable:$true] %s577
      %580 = dma.vmem_to_hbm [thread:$0]  %s578, 32, %s9, [#allocation3]
    $region41: #{tpu_custom_call.1} parent=1 // pred_fallthru
      _
    // Predicated region
    $region42: #{tpu_custom_call.1} parent=1 // pred_check
      _
    $region43: #{tpu_custom_call.1} parent=1 // pred_check_branch
      %582 = sbr.rel (0) target = $region45
    $region44: #{tpu_custom_call.1} parent=1 // pred_region
      %583 = dma.done [#allocation3], 32
    $region45: #{tpu_custom_call.1} parent=1 // pred_fallthru
      _
    %584 = vsyncpa [#allocation3], 1

</llo_original>
